<compile_context>
chip_gen: v5e
topology: v5e:2x2
jax: 0.10.0
libtpu: 0.0.40
codegen_flags: <defaults>
</compile_context>

<pallas_src>
from functools import partial

import jax
import jax.numpy as jnp
from jax import lax
from jax.experimental import pallas as pl
from jax.experimental.pallas import tpu as pltpu

_MIB = 1024 * 1024


def _round_up(x, m):
    return ((x + m - 1) // m) * m


def _vmem_capacity_bytes():
    # Trace-time hardware query; fall back to the smallest current generation
    # (v7x: 64 MiB per TensorCore) so the tiling is always safe.
    try:
        info = pltpu.get_tpu_info()
        cap = getattr(info, "vmem_capacity_bytes", None)
        if cap:
            return int(cap)
    except Exception:
        pass
    return 64 * _MIB


def _onehot_kernel(idx_ref, zt_ref, out_ref, *, n_chunk):
    # idx_ref: (2, TE) int32 -- row 0 = head node ids, row 1 = tail node ids
    # zt_ref:  (D, N_pad)    -- transposed embedding table, single VMEM copy
    # out_ref: (1, TE)       -- lane-dense per-edge inner products
    te = idx_ref.shape[1]
    d, n_padded = zt_ref.shape

    idx = idx_ref[...]
    h_idx = idx[0:1, :]  # (1, TE)
    t_idx = idx[1:2, :]  # (1, TE)

    head = jnp.zeros((d, te), jnp.float32)
    tail = jnp.zeros((d, te), jnp.float32)

    # Static chunking over N bounds the one-hot working set (vreg pressure)
    # while keeping everything on the MXU / VALU.
    for c0 in range(0, n_padded, n_chunk):
        c1 = min(n_padded, c0 + n_chunk)
        ids = lax.broadcasted_iota(jnp.int32, (c1 - c0, te), 0) + c0   # (C, TE)
        zt_c = zt_ref[:, c0:c1]                                        # (D, C)
        # One-hot built directly in z's native dtype (bf16 stays bf16).
        oh_h = (h_idx == ids).astype(zt_c.dtype)                       # (C, TE)
        oh_t = (t_idx == ids).astype(zt_c.dtype)                       # (C, TE)
        # Two separate MXU matmuls (no (C, 2*TE) concat materialization).
        head = head + jnp.dot(zt_c, oh_h, preferred_element_type=jnp.float32)
        tail = tail + jnp.dot(zt_c, oh_t, preferred_element_type=jnp.float32)

    # Sublane reduce over D -> (1, TE): edges stay on lanes, store is lane-dense.
    out_ref[...] = jnp.sum(head * tail, axis=0, keepdims=True).astype(out_ref.dtype)


def _gathered_kernel(head_ref, tail_ref, out_ref):
    # head_ref / tail_ref: (TE, D) pre-gathered rows (contiguous HBM blocks,
    #                      no wrapper transpose).  out_ref: (TE, 1).
    prod = head_ref[...].astype(jnp.float32) * tail_ref[...].astype(jnp.float32)
    out_ref[...] = jnp.sum(prod, axis=-1, keepdims=True).astype(out_ref.dtype)


def inner_product_decoder(z, edge_label_index, *, te=None, onehot_max_nodes=None):
    """Pallas implementation of InnerProductDecoder.forward.

    z:                [N, D] float embeddings
    edge_label_index: [2, E] integer node indices
    returns:          [E] per-edge inner products, dtype = z.dtype
    """
    n_nodes, d = z.shape
    e = edge_label_index.shape[1]
    itemsize = jnp.dtype(z.dtype).itemsize
    vmem_cap = _vmem_capacity_bytes()

    head_idx = edge_label_index[0].astype(jnp.int32)
    tail_idx = edge_label_index[1].astype(jnp.int32)

    if onehot_max_nodes is None:
        # bf16 one-hot build packs 16x128 per vreg and runs the MXU at native
        # bf16 rate on v6e/v7x -> crossover vs. the gathered path is much later
        # than for f32 (f32 MXU passes are several x slower, keep it low).
        onehot_max_nodes = 1024 if z.dtype == jnp.bfloat16 else 256

    # Footprint of the VMEM-resident transposed table (lane/sublane padded).
    n_pad = _round_up(max(n_nodes, 1), 128)
    d_sub = _round_up(d, 8)
    zt_vmem_bytes = d_sub * n_pad * itemsize
    use_onehot = (n_nodes <= onehot_max_nodes) and (zt_vmem_bytes <= vmem_cap // 4)

    if use_onehot:
        # ---------------- one-hot MXU gather path (small / medium N) --------
        n_chunk = min(512, n_pad)

        te_ = te if te is not None else 1024
        te_ = max(128, (min(te_, _round_up(e, 128)) // 128) * 128)
        # Clamp te so the per-tile accumulators + one-hot chunks stay well
        # inside VMEM alongside the resident table (v7x: 64 MiB total).
        per_te_bytes = 2 * d_sub * 4 + 2 * n_chunk * itemsize + 32
        budget = max(vmem_cap // 2 - zt_vmem_bytes, 2 * _MIB)
        max_te = max(128, budget // max(per_te_bytes, 1))
        te_ = max(128, min(te_, (max_te // 128) * 128))

        e_pad = _round_up(e, te_)
        pad = e_pad - e
        if pad:
            head_idx = jnp.pad(head_idx, (0, pad))  # pad with node 0; sliced off
            tail_idx = jnp.pad(tail_idx, (0, pad))
        idx = jnp.stack([head_idx, tail_idx], axis=0)            # (2, E_pad)
        zt = jnp.pad(z.T, ((0, 0), (0, n_pad - n_nodes)))        # (D, N_pad), tiny

        grid = (e_pad // te_,)
        vmem_limit = int(min(vmem_cap,
                             max(32 * _MIB,
                                 zt_vmem_bytes + 2 * te_ * per_te_bytes + 4 * _MIB)))
        cost = pl.CostEstimate(
            flops=int(4 * d * n_pad * e_pad),
            transcendentals=0,
            bytes_accessed=int(d * n_pad * itemsize + 2 * e_pad * 4 + e_pad * itemsize),
        )

        out2d = pl.pallas_call(
            partial(_onehot_kernel, n_chunk=n_chunk),
            out_shape=jax.ShapeDtypeStruct((1, e_pad), z.dtype),
            grid_spec=pltpu.PrefetchScalarGridSpec(
                num_scalar_prefetch=0,
                grid=grid,
                in_specs=[
                    pl.BlockSpec((2, te_), lambda i: (0, i)),            # stacked idx tile
                    pl.BlockSpec(memory_space=pltpu.MemorySpace.VMEM),   # whole z.T, 1 copy
                ],
                out_specs=pl.BlockSpec((1, te_), lambda i: (0, i)),
            ),
            compiler_params=pltpu.CompilerParams(
                dimension_semantics=("parallel",),
                vmem_limit_bytes=vmem_limit,
            ),
            cost_estimate=cost,
        )(idx, zt)
        return out2d[0, :e]

    # ---------------- gathered streaming path (large N) ---------------------
    # TODO(synk): for very large N an in-kernel per-row DMA gather (scalar
    # prefetch of the indices + manual make_async_copy) would remove the
    # remaining wrapper-side jnp.take HBM pass as well.
    d_lanes = _round_up(d, 128)
    te_ = te if te is not None else 2048  # big tiles amortize per-step overhead
    # 2 inputs x 2 pipeline buffers x (te, d_lanes) + double-buffered (te,1) out
    per_edge_bytes = 4 * d_lanes * itemsize + 2 * 128 * 4
    max_te = max(128, (vmem_cap // 2) // max(per_edge_bytes, 1))
    te_ = min(te_, max_te, _round_up(e, 128))
    te_ = max(128, (te_ // 128) * 128)

    e_pad = _round_up(e, te_)
    pad = e_pad - e
    if pad:
        head_idx = jnp.pad(head_idx, (0, pad))
        tail_idx = jnp.pad(tail_idx, (0, pad))

    # Single XLA gather, NO transpose (the transposes were two extra full
    # ExD HBM read+write passes on a memory-bound kernel).
    head_rows = jnp.take(z, head_idx, axis=0)   # (E_pad, D) contiguous
    tail_rows = jnp.take(z, tail_idx, axis=0)   # (E_pad, D) contiguous

    grid = (e_pad // te_,)
    vmem_limit = int(min(vmem_cap, max(32 * _MIB, te_ * per_edge_bytes + 4 * _MIB)))
    cost = pl.CostEstimate(
        flops=int(2 * d * e_pad),
        transcendentals=0,
        bytes_accessed=int((2 * e_pad * d + e_pad) * itemsize),
    )

    out2d = pl.pallas_call(
        _gathered_kernel,
        out_shape=jax.ShapeDtypeStruct((e_pad, 1), z.dtype),
        grid_spec=pltpu.PrefetchScalarGridSpec(
            num_scalar_prefetch=0,
            grid=grid,
            in_specs=[
                pl.BlockSpec((te_, d), lambda i: (i, 0)),
                pl.BlockSpec((te_, d), lambda i: (i, 0)),
            ],
            out_specs=pl.BlockSpec((te_, 1), lambda i: (i, 0)),
        ),
        compiler_params=pltpu.CompilerParams(
            dimension_semantics=("parallel",),
            vmem_limit_bytes=vmem_limit,
        ),
        cost_estimate=cost,
    )(head_rows, tail_rows)
    return out2d[:e, 0]


if __name__ == "__main__":
    # Deterministic small example: 8 nodes, hidden=32, 200 labeled edges
    # (non-multiple of 128 to exercise the padding path).
    key = jax.random.PRNGKey(0)
    kz, ke = jax.random.split(key)

    n_nodes, hidden, n_edges = 8, 32, 200
    z = jax.random.normal(kz, (n_nodes, hidden), dtype=jnp.float32)
    edge_label_index = jax.random.randint(
        ke, (2, n_edges), 0, n_nodes, dtype=jnp.int32)

    # Pure-JAX reference (mirrors the PyTorch forward).
    ref = jnp.sum(jnp.take(z, edge_label_index[0], axis=0)
                  * jnp.take(z, edge_label_index[1], axis=0), axis=-1)

    # One-hot (small/medium-N) path.
    out = jax.block_until_ready(inner_product_decoder(z, edge_label_index))
    assert out.shape == (n_edges,)
    assert out.dtype == z.dtype
    assert jnp.allclose(out, ref, atol=1e-5, rtol=1e-5)

    # Gathered streaming (large-N) path, forced for coverage.
    out_g = jax.block_until_ready(
        inner_product_decoder(z, edge_label_index, onehot_max_nodes=0))
    assert out_g.shape == (n_edges,)
    assert out_g.dtype == z.dtype
    assert jnp.allclose(out_g, ref, atol=1e-5, rtol=1e-5)

    print("KERNEL_OK")
</pallas_src>

<mosaic_0001>
module attributes {stable_mosaic.version = 11 : i64} {
  func.func @_onehot_kernel(%arg0: i32, %arg1: memref<2x256xi32, #tpu.memory_space<vmem>>, %arg2: memref<32x128xf32, #tpu.memory_space<vmem>>, %arg3: memref<1x256xf32, #tpu.memory_space<vmem>>) attributes {dimension_semantics = [#tpu.dimension_semantics<parallel>], iteration_bounds = array<i64: 1>, scalar_prefetch = 0 : i64, scratch_operands = 0 : i64, tpu.core_type = #tpu.core_type<tc>, window_params = [{transform_indices = @transform_0, window_bounds = array<i64: 2, 256>}, {pipeline_mode = #tpu.pipeline_mode<synchronous>, transform_indices = @transform_1, window_bounds = array<i64: 32, 128>}, {transform_indices = @transform_2, window_bounds = array<i64: 1, 256>}]} {
    %c0 = arith.constant 0 : index
    %c0_0 = arith.constant 0 : index
    %0 = vector.load %arg1[%c0, %c0_0] : memref<2x256xi32, #tpu.memory_space<vmem>>, vector<2x256xi32>
    %1 = vector.extract_strided_slice %0 {offsets = [0, 0], sizes = [1, 256], strides = [1, 1]} : vector<2x256xi32> to vector<1x256xi32>
    %2 = vector.extract_strided_slice %0 {offsets = [1, 0], sizes = [1, 256], strides = [1, 1]} : vector<2x256xi32> to vector<1x256xi32>
    %cst = arith.constant 0.000000e+00 : f32
    %3 = vector.broadcast %cst : f32 to vector<32x256xf32>
    %cst_1 = arith.constant 0.000000e+00 : f32
    %4 = vector.broadcast %cst_1 : f32 to vector<32x256xf32>
    %5 = tpu.iota {dimensions = array<i32: 0>} : vector<128x256xi32>
    %c0_i32 = arith.constant 0 : i32
    %6 = vector.broadcast %c0_i32 : i32 to vector<128x256xi32>
    %7 = arith.addi %5, %6 : vector<128x256xi32>
    %c0_2 = arith.constant 0 : index
    %c0_3 = arith.constant 0 : index
    %8 = vector.load %arg2[%c0_2, %c0_3] : memref<32x128xf32, #tpu.memory_space<vmem>>, vector<32x128xf32>
    %9 = vector.broadcast %1 : vector<1x256xi32> to vector<128x256xi32>
    %10 = arith.cmpi eq, %9, %7 : vector<128x256xi32>
    %11 = arith.extui %10 : vector<128x256xi1> to vector<128x256xi32>
    %12 = arith.sitofp %11 : vector<128x256xi32> to vector<128x256xf32>
    %13 = vector.broadcast %2 : vector<1x256xi32> to vector<128x256xi32>
    %14 = arith.cmpi eq, %13, %7 : vector<128x256xi32>
    %15 = arith.extui %14 : vector<128x256xi1> to vector<128x256xi32>
    %16 = arith.sitofp %15 : vector<128x256xi32> to vector<128x256xf32>
    %cst_4 = arith.constant dense<0.000000e+00> : vector<32x256xf32>
    %17 = tpu.matmul %8, %12, %cst_4 {dimension_numbers = #tpu.dot_dimension_numbers<[1], [0], [0], [1], [0, 0, 1, 1], [], []>} : vector<32x128xf32>, vector<128x256xf32>, vector<32x256xf32> -> vector<32x256xf32>
    %18 = arith.addf %3, %17 : vector<32x256xf32>
    %cst_5 = arith.constant dense<0.000000e+00> : vector<32x256xf32>
    %19 = tpu.matmul %8, %16, %cst_5 {dimension_numbers = #tpu.dot_dimension_numbers<[1], [0], [0], [1], [0, 0, 1, 1], [], []>} : vector<32x128xf32>, vector<128x256xf32>, vector<32x256xf32> -> vector<32x256xf32>
    %20 = arith.addf %4, %19 : vector<32x256xf32>
    %21 = arith.mulf %18, %20 : vector<32x256xf32>
    %cst_6 = arith.constant dense<0.000000e+00> : vector<256xf32>
    %22 = vector.multi_reduction <add>, %21, %cst_6 [0] : vector<32x256xf32> to vector<256xf32>
    %23 = vector.shape_cast %22 : vector<256xf32> to vector<1x256xf32>
    %c0_7 = arith.constant 0 : index
    %c0_8 = arith.constant 0 : index
    %24 = vector.load %arg3[%c0_7, %c0_8] : memref<1x256xf32, #tpu.memory_space<vmem>>, vector<1x256xf32>
    tpu.vector_store %arg3[%c0_7, %c0_8], %23 {strides = array<i32>} : memref<1x256xf32, #tpu.memory_space<vmem>>, vector<1x256xf32>,
    return
  }
  func.func @transform_0(%arg0: i32) -> (i32, i32) {
    %c0_i32 = arith.constant 0 : i32
    %c0_i32_0 = arith.constant 0 : i32
    return %c0_i32, %arg0 : i32, i32
  }
  func.func @transform_1(%arg0: i32) -> (i32, i32) {
    %c0_i32 = arith.constant 0 : i32
    %c0_i32_0 = arith.constant 0 : i32
    %c0_i32_1 = arith.constant 0 : i32
    return %c0_i32, %c0_i32_0 : i32, i32
  }
  func.func @transform_2(%arg0: i32) -> (i32, i32) {
    %c0_i32 = arith.constant 0 : i32
    %c0_i32_0 = arith.constant 0 : i32
    return %c0_i32, %arg0 : i32, i32
  }
}

</mosaic_0001>

<llo_original>
// kernel: tpu_custom_call.1
$region0: #{tpu_custom_call.1}
  #allocation0 [shape = 'u32[]', space=smem, size = 0x4, offset = 0x4, fixed_abs, tag = 'smem constant byte address 0x4 - core index']
  #allocation1 [shape = 'u32[72,128]{1,0:T(1,128)}', space=vmem, size = 0x9000, scoped, tag = 'internal scratch']
  %s0 = inlined_call_operand.hbm [shape: s32[2,256], index: 0, kind: input, shape index: {}]
  %s1 = inlined_call_operand.hbm [shape: f32[32,128], index: 1, kind: input, shape index: {}]
  %s2 = inlined_call_operand.hbm [shape: f32[1,256], index: 2, kind: output, shape index: {}]
  %s3 = sld [smem:[#allocation0]]
  $region26: #{tpu_custom_call.1} parent=0
    _
  %s5 = ssub.s32 1, %s3
  %s6 = scalar_select 0, %s5, %s3
  $region1: #{tpu_custom_call.1} parent=0
    #allocation2 [shape = 'u8[2048]{0}', space=vmem, size = 0x800, scoped, tag = 'input window, operand 0, single buffered']
    #allocation3 [shape = 's32[1]{0}', space=sflag, size = 0x4, scoped, tag = 'scoped memory for tpu_custom_call.1']
    #allocation4 [shape = 's32[1]{0}', space=sflag, size = 0x4, scoped, tag = 'scoped memory for tpu_custom_call.1']
    #allocation5 [shape = 'u8[16384]{0}', space=vmem, size = 0x4000, scoped, tag = 'input window, operand 1, single buffered']
    #allocation6 [shape = 's32[1]{0}', space=sflag, size = 0x4, scoped, tag = 'scoped memory for tpu_custom_call.1']
    #allocation7 [shape = 'u8[1024]{0}', space=vmem, size = 0x400, scoped, tag = 'output window, operand 0, single buffered']
    %7 = vsyncpa [#allocation3], 0
    %8 = vsyncpa [#allocation6], 0
    %9 = vsyncpa [#allocation4], 0
    // Predicated region
    $region2: #{tpu_custom_call.1} parent=1 // pred_check
      _
    $region3: #{tpu_custom_call.1} parent=1 // pred_check_branch
      %11 = sbr.rel (0) target = $region5
    $region4: #{tpu_custom_call.1} parent=1 // pred_region
      %13 = vsyncadd [#allocation3], 0
      %s15 = sshll.u32 %s0, 4
      %s16 = int_to_ptr.hbm [resolvable:$true] %s15
      %s17 = sshll.u32 [#allocation2], 4
      %s18 = int_to_ptr.vmem [resolvable:$true] %s17
      %20 = dma.hbm_to_vmem [thread:$0]  %s16, 64, %s18, [#allocation3]
    $region5: #{tpu_custom_call.1} parent=1 // pred_fallthru
      _
    // Predicated region
    $region6: #{tpu_custom_call.1} parent=1 // pred_check
      _
    $region7: #{tpu_custom_call.1} parent=1 // pred_check_branch
      %22 = sbr.rel (0) target = $region9
    $region8: #{tpu_custom_call.1} parent=1 // pred_region
      %24 = vsyncadd [#allocation6], 0
      %s25 = sshll.u32 %s1, 4
      %s26 = int_to_ptr.hbm [resolvable:$true] %s25
      %s27 = sshll.u32 [#allocation5], 4
      %s28 = int_to_ptr.vmem [resolvable:$true] %s27
      %33 = dma.hbm_to_vmem [thread:$0]  %s26, 512, %s28, [#allocation6], 128, 128, 8
    $region9: #{tpu_custom_call.1} parent=1 // pred_fallthru
      _
    // Predicated region
    $region10: #{tpu_custom_call.1} parent=1 // pred_check
      _
    $region11: #{tpu_custom_call.1} parent=1 // pred_check_branch
      %35 = sbr.rel (0) target = $region13
    $region12: #{tpu_custom_call.1} parent=1 // pred_region
      %37 = dma.done [#allocation3], 64
    $region13: #{tpu_custom_call.1} parent=1 // pred_fallthru
      _
    // Predicated region
    $region14: #{tpu_custom_call.1} parent=1 // pred_check
      _
    $region15: #{tpu_custom_call.1} parent=1 // pred_check_branch
      %39 = sbr.rel (0) target = $region17
    $region16: #{tpu_custom_call.1} parent=1 // pred_region
      %41 = dma.done [#allocation6], 512
    $region17: #{tpu_custom_call.1} parent=1 // pred_fallthru
      _
    %v42 = vld [vmem:[#allocation2] sm:$0xf]
    %v43 = vlaneseq
    %v44 = vshrl.u32 %v43, 7
    %v45 = vadd.s32 %v44, 8
    %v46 = vadd.s32 %v44, 16
    %v47 = vadd.s32 %v44, 24
    %v48 = vadd.s32 %v44, 32
    %v49 = vadd.s32 %v44, 40
    %v50 = vadd.s32 %v44, 48
    %v51 = vadd.s32 %v44, 56
    %v52 = vadd.s32 %v44, 64
    %v53 = vadd.s32 %v44, 72
    %v54 = vadd.s32 %v44, 80
    %v55 = vadd.s32 %v44, 88
    %v56 = vadd.s32 %v44, 96
    %v57 = vadd.s32 %v44, 104
    %v58 = vadd.s32 %v44, 112
    %v59 = vadd.s32 %v44, 120
    %v60 = vld [vmem:[#allocation5] sm:$0xff]
    %v61 = vld [vmem:[#allocation5 + $0x8] sm:$0xff]
    %v62 = vld [vmem:[#allocation5 + $0x10] sm:$0xff]
    %v63 = vld [vmem:[#allocation5 + $0x18] sm:$0xff]
    %v64 = vperm.slane %v42, 0
    %v65 = vperm.slane %v42, 2
    %v66 = vperm.slane %v64, 0
    %v67 = vperm.slane %v65, 0
    %vm68 = vcmp.eq.s32.totalorder %v66, %v44
    %vm69 = vcmp.eq.s32.totalorder %v67, %v44
    %vm70 = vcmp.eq.s32.totalorder %v66, %v45
    %vm71 = vcmp.eq.s32.totalorder %v67, %v45
    %vm72 = vcmp.eq.s32.totalorder %v66, %v46
    %vm73 = vcmp.eq.s32.totalorder %v67, %v46
    %vm74 = vcmp.eq.s32.totalorder %v66, %v47
    %vm75 = vcmp.eq.s32.totalorder %v67, %v47
    %vm76 = vcmp.eq.s32.totalorder %v66, %v48
    %vm77 = vcmp.eq.s32.totalorder %v67, %v48
    %vm78 = vcmp.eq.s32.totalorder %v66, %v49
    %vm79 = vcmp.eq.s32.totalorder %v67, %v49
    %vm80 = vcmp.eq.s32.totalorder %v66, %v50
    %vm81 = vcmp.eq.s32.totalorder %v67, %v50
    %vm82 = vcmp.eq.s32.totalorder %v66, %v51
    %vm83 = vcmp.eq.s32.totalorder %v67, %v51
    %vm84 = vcmp.eq.s32.totalorder %v66, %v52
    %vm85 = vcmp.eq.s32.totalorder %v67, %v52
    %vm86 = vcmp.eq.s32.totalorder %v66, %v53
    %vm87 = vcmp.eq.s32.totalorder %v67, %v53
    %vm88 = vcmp.eq.s32.totalorder %v66, %v54
    %vm89 = vcmp.eq.s32.totalorder %v67, %v54
    %vm90 = vcmp.eq.s32.totalorder %v66, %v55
    %vm91 = vcmp.eq.s32.totalorder %v67, %v55
    %vm92 = vcmp.eq.s32.totalorder %v66, %v56
    %vm93 = vcmp.eq.s32.totalorder %v67, %v56
    %vm94 = vcmp.eq.s32.totalorder %v66, %v57
    %vm95 = vcmp.eq.s32.totalorder %v67, %v57
    %vm96 = vcmp.eq.s32.totalorder %v66, %v58
    %vm97 = vcmp.eq.s32.totalorder %v67, %v58
    %vm98 = vcmp.eq.s32.totalorder %v66, %v59
    %vm99 = vcmp.eq.s32.totalorder %v67, %v59
    %v100 = vsel %vm68, 1, 0
    %v101 = vsel %vm69, 1, 0
    %v102 = vsel %vm70, 1, 0
    %v103 = vsel %vm71, 1, 0
    %v104 = vsel %vm72, 1, 0
    %v105 = vsel %vm73, 1, 0
    %v106 = vsel %vm74, 1, 0
    %v107 = vsel %vm75, 1, 0
    %v108 = vsel %vm76, 1, 0
    %v109 = vsel %vm77, 1, 0
    %v110 = vsel %vm78, 1, 0
    %v111 = vsel %vm79, 1, 0
    %v112 = vsel %vm80, 1, 0
    %v113 = vsel %vm81, 1, 0
    %v114 = vsel %vm82, 1, 0
    %v115 = vsel %vm83, 1, 0
    %v116 = vsel %vm84, 1, 0
    %v117 = vsel %vm85, 1, 0
    %v118 = vsel %vm86, 1, 0
    %v119 = vsel %vm87, 1, 0
    %v120 = vsel %vm88, 1, 0
    %v121 = vsel %vm89, 1, 0
    %v122 = vsel %vm90, 1, 0
    %v123 = vsel %vm91, 1, 0
    %v124 = vsel %vm92, 1, 0
    %v125 = vsel %vm93, 1, 0
    %v126 = vsel %vm94, 1, 0
    %v127 = vsel %vm95, 1, 0
    %v128 = vsel %vm96, 1, 0
    %v129 = vsel %vm97, 1, 0
    %v130 = vsel %vm98, 1, 0
    %v131 = vsel %vm99, 1, 0
    %v132 = vcvt.s32.f32 %v100
    %v133 = vcvt.s32.f32 %v101
    %v134 = vcvt.s32.f32 %v102
    %v135 = vcvt.s32.f32 %v103
    %v136 = vcvt.s32.f32 %v104
    %v137 = vcvt.s32.f32 %v105
    %v138 = vcvt.s32.f32 %v106
    %v139 = vcvt.s32.f32 %v107
    %v140 = vcvt.s32.f32 %v108
    %v141 = vcvt.s32.f32 %v109
    %v142 = vcvt.s32.f32 %v110
    %v143 = vcvt.s32.f32 %v111
    %v144 = vcvt.s32.f32 %v112
    %v145 = vcvt.s32.f32 %v113
    %v146 = vcvt.s32.f32 %v114
    %v147 = vcvt.s32.f32 %v115
    %v148 = vcvt.s32.f32 %v116
    %v149 = vcvt.s32.f32 %v117
    %v150 = vcvt.s32.f32 %v118
    %v151 = vcvt.s32.f32 %v119
    %v152 = vcvt.s32.f32 %v120
    %v153 = vcvt.s32.f32 %v121
    %v154 = vcvt.s32.f32 %v122
    %v155 = vcvt.s32.f32 %v123
    %v156 = vcvt.s32.f32 %v124
    %v157 = vcvt.s32.f32 %v125
    %v158 = vcvt.s32.f32 %v126
    %v159 = vcvt.s32.f32 %v127
    %v160 = vcvt.s32.f32 %v128
    %v161 = vcvt.s32.f32 %v129
    %v162 = vcvt.s32.f32 %v130
    %v163 = vcvt.s32.f32 %v131
    %v164 = vperm.slane %v42, 1
    %v165 = vperm.slane %v42, 3
    %v166 = vperm.slane %v164, 1
    %v167 = vperm.slane %v165, 1
    %vm168 = vcmp.eq.s32.totalorder %v166, %v44
    %vm169 = vcmp.eq.s32.totalorder %v167, %v44
    %vm170 = vcmp.eq.s32.totalorder %v166, %v45
    %vm171 = vcmp.eq.s32.totalorder %v167, %v45
    %vm172 = vcmp.eq.s32.totalorder %v166, %v46
    %vm173 = vcmp.eq.s32.totalorder %v167, %v46
    %vm174 = vcmp.eq.s32.totalorder %v166, %v47
    %vm175 = vcmp.eq.s32.totalorder %v167, %v47
    %vm176 = vcmp.eq.s32.totalorder %v166, %v48
    %vm177 = vcmp.eq.s32.totalorder %v167, %v48
    %vm178 = vcmp.eq.s32.totalorder %v166, %v49
    %vm179 = vcmp.eq.s32.totalorder %v167, %v49
    %vm180 = vcmp.eq.s32.totalorder %v166, %v50
    %vm181 = vcmp.eq.s32.totalorder %v167, %v50
    %vm182 = vcmp.eq.s32.totalorder %v166, %v51
    %vm183 = vcmp.eq.s32.totalorder %v167, %v51
    %vm184 = vcmp.eq.s32.totalorder %v166, %v52
    %vm185 = vcmp.eq.s32.totalorder %v167, %v52
    %vm186 = vcmp.eq.s32.totalorder %v166, %v53
    %vm187 = vcmp.eq.s32.totalorder %v167, %v53
    %vm188 = vcmp.eq.s32.totalorder %v166, %v54
    %vm189 = vcmp.eq.s32.totalorder %v167, %v54
    %vm190 = vcmp.eq.s32.totalorder %v166, %v55
    %vm191 = vcmp.eq.s32.totalorder %v167, %v55
    %vm192 = vcmp.eq.s32.totalorder %v166, %v56
    %vm193 = vcmp.eq.s32.totalorder %v167, %v56
    %vm194 = vcmp.eq.s32.totalorder %v166, %v57
    %vm195 = vcmp.eq.s32.totalorder %v167, %v57
    %vm196 = vcmp.eq.s32.totalorder %v166, %v58
    %vm197 = vcmp.eq.s32.totalorder %v167, %v58
    %vm198 = vcmp.eq.s32.totalorder %v166, %v59
    %vm199 = vcmp.eq.s32.totalorder %v167, %v59
    %v200 = vsel %vm168, 1, 0
    %v201 = vsel %vm169, 1, 0
    %v202 = vsel %vm170, 1, 0
    %v203 = vsel %vm171, 1, 0
    %v204 = vsel %vm172, 1, 0
    %v205 = vsel %vm173, 1, 0
    %v206 = vsel %vm174, 1, 0
    %v207 = vsel %vm175, 1, 0
    %v208 = vsel %vm176, 1, 0
    %v209 = vsel %vm177, 1, 0
    %v210 = vsel %vm178, 1, 0
    %v211 = vsel %vm179, 1, 0
    %v212 = vsel %vm180, 1, 0
    %v213 = vsel %vm181, 1, 0
    %v214 = vsel %vm182, 1, 0
    %v215 = vsel %vm183, 1, 0
    %v216 = vsel %vm184, 1, 0
    %v217 = vsel %vm185, 1, 0
    %v218 = vsel %vm186, 1, 0
    %v219 = vsel %vm187, 1, 0
    %v220 = vsel %vm188, 1, 0
    %v221 = vsel %vm189, 1, 0
    %v222 = vsel %vm190, 1, 0
    %v223 = vsel %vm191, 1, 0
    %v224 = vsel %vm192, 1, 0
    %v225 = vsel %vm193, 1, 0
    %v226 = vsel %vm194, 1, 0
    %v227 = vsel %vm195, 1, 0
    %v228 = vsel %vm196, 1, 0
    %v229 = vsel %vm197, 1, 0
    %v230 = vsel %vm198, 1, 0
    %v231 = vsel %vm199, 1, 0
    %v232 = vcvt.s32.f32 %v200
    %v233 = vcvt.s32.f32 %v201
    %v234 = vcvt.s32.f32 %v202
    %v235 = vcvt.s32.f32 %v203
    %v236 = vcvt.s32.f32 %v204
    %v237 = vcvt.s32.f32 %v205
    %v238 = vcvt.s32.f32 %v206
    %v239 = vcvt.s32.f32 %v207
    %v240 = vcvt.s32.f32 %v208
    %v241 = vcvt.s32.f32 %v209
    %v242 = vcvt.s32.f32 %v210
    %v243 = vcvt.s32.f32 %v211
    %v244 = vcvt.s32.f32 %v212
    %v245 = vcvt.s32.f32 %v213
    %v246 = vcvt.s32.f32 %v214
    %v247 = vcvt.s32.f32 %v215
    %v248 = vcvt.s32.f32 %v216
    %v249 = vcvt.s32.f32 %v217
    %v250 = vcvt.s32.f32 %v218
    %v251 = vcvt.s32.f32 %v219
    %v252 = vcvt.s32.f32 %v220
    %v253 = vcvt.s32.f32 %v221
    %v254 = vcvt.s32.f32 %v222
    %v255 = vcvt.s32.f32 %v223
    %v256 = vcvt.s32.f32 %v224
    %v257 = vcvt.s32.f32 %v225
    %v258 = vcvt.s32.f32 %v226
    %v259 = vcvt.s32.f32 %v227
    %v260 = vcvt.s32.f32 %v228
    %v261 = vcvt.s32.f32 %v229
    %v262 = vcvt.s32.f32 %v230
    %v263 = vcvt.s32.f32 %v231
    %264 = vmatpush.msra.mxu0 %v162
    %265 = vmatpush.msra.mxu0 %v160
    %266 = vmatpush.msra.mxu0 %v158
    %267 = vmatpush.msra.mxu0 %v156
    %268 = vmatpush.msra.mxu0 %v154
    %269 = vmatpush.msra.mxu0 %v152
    %270 = vmatpush.msra.mxu0 %v150
    %271 = vmatpush.msra.mxu0 %v148
    %272 = vmatpush.msra.mxu0 %v146
    %273 = vmatpush.msra.mxu0 %v144
    %274 = vmatpush.msra.mxu0 %v142
    %275 = vmatpush.msra.mxu0 %v140
    %276 = vmatpush.msra.mxu0 %v138
    %277 = vmatpush.msra.mxu0 %v136
    %278 = vmatpush.msra.mxu0 %v134
    %279 = vmatpush.msra.mxu0 %v132
    %280 = vmatmul.f32.gmra.mxu0 %v60
    %v281 = vpop.f32.mrf.mxu0
    %v282 = vadd.f32 0.0, %v281
    %283 = vmatmul.f32.gmra.mxu0 %v61
    %v284 = vpop.f32.mrf.mxu0
    %v285 = vadd.f32 0.0, %v284
    %286 = vmatmul.f32.gmra.mxu0 %v62
    %v287 = vpop.f32.mrf.mxu0
    %v288 = vadd.f32 0.0, %v287
    %289 = vmatmul.f32.gmra.mxu0 %v63
    %v290 = vpop.f32.mrf.mxu0
    %v291 = vadd.f32 0.0, %v290
    %292 = vdwg.mxu0
    %293 = vmatpush.msra.mxu0 %v163
    %294 = vmatpush.msra.mxu0 %v161
    %295 = vmatpush.msra.mxu0 %v159
    %296 = vmatpush.msra.mxu0 %v157
    %297 = vmatpush.msra.mxu0 %v155
    %298 = vmatpush.msra.mxu0 %v153
    %299 = vmatpush.msra.mxu0 %v151
    %300 = vmatpush.msra.mxu0 %v149
    %301 = vmatpush.msra.mxu0 %v147
    %302 = vmatpush.msra.mxu0 %v145
    %303 = vmatpush.msra.mxu0 %v143
    %304 = vmatpush.msra.mxu0 %v141
    %305 = vmatpush.msra.mxu0 %v139
    %306 = vmatpush.msra.mxu0 %v137
    %307 = vmatpush.msra.mxu0 %v135
    %308 = vmatpush.msra.mxu0 %v133
    %309 = vmatmul.f32.gmra.mxu0 %v60
    %v310 = vpop.f32.mrf.mxu0
    %v311 = vadd.f32 0.0, %v310
    %312 = vmatmul.f32.gmra.mxu0 %v61
    %v313 = vpop.f32.mrf.mxu0
    %v314 = vadd.f32 0.0, %v313
    %315 = vmatmul.f32.gmra.mxu0 %v62
    %v316 = vpop.f32.mrf.mxu0
    %v317 = vadd.f32 0.0, %v316
    %318 = vmatmul.f32.gmra.mxu0 %v63
    %v319 = vpop.f32.mrf.mxu0
    %v320 = vadd.f32 0.0, %v319
    %321 = vdwg.mxu0
    %322 = vmatpush.msra.mxu0 %v262
    %323 = vmatpush.msra.mxu0 %v260
    %324 = vmatpush.msra.mxu0 %v258
    %325 = vmatpush.msra.mxu0 %v256
    %326 = vmatpush.msra.mxu0 %v254
    %327 = vmatpush.msra.mxu0 %v252
    %328 = vmatpush.msra.mxu0 %v250
    %329 = vmatpush.msra.mxu0 %v248
    %330 = vmatpush.msra.mxu0 %v246
    %331 = vmatpush.msra.mxu0 %v244
    %332 = vmatpush.msra.mxu0 %v242
    %333 = vmatpush.msra.mxu0 %v240
    %334 = vmatpush.msra.mxu0 %v238
    %335 = vmatpush.msra.mxu0 %v236
    %336 = vmatpush.msra.mxu0 %v234
    %337 = vmatpush.msra.mxu0 %v232
    %338 = vmatmul.f32.gmra.mxu0 %v60
    %v339 = vpop.f32.mrf.mxu0
    %v340 = vadd.f32 0.0, %v339
    %341 = vmatmul.f32.gmra.mxu0 %v61
    %v342 = vpop.f32.mrf.mxu0
    %v343 = vadd.f32 0.0, %v342
    %344 = vmatmul.f32.gmra.mxu0 %v62
    %v345 = vpop.f32.mrf.mxu0
    %v346 = vadd.f32 0.0, %v345
    %347 = vmatmul.f32.gmra.mxu0 %v63
    %v348 = vpop.f32.mrf.mxu0
    %v349 = vadd.f32 0.0, %v348
    %350 = vdwg.mxu0
    %351 = vmatpush.msra.mxu0 %v263
    %352 = vmatpush.msra.mxu0 %v261
    %353 = vmatpush.msra.mxu0 %v259
    %354 = vmatpush.msra.mxu0 %v257
    %355 = vmatpush.msra.mxu0 %v255
    %356 = vmatpush.msra.mxu0 %v253
    %357 = vmatpush.msra.mxu0 %v251
    %358 = vmatpush.msra.mxu0 %v249
    %359 = vmatpush.msra.mxu0 %v247
    %360 = vmatpush.msra.mxu0 %v245
    %361 = vmatpush.msra.mxu0 %v243
    %362 = vmatpush.msra.mxu0 %v241
    %363 = vmatpush.msra.mxu0 %v239
    %364 = vmatpush.msra.mxu0 %v237
    %365 = vmatpush.msra.mxu0 %v235
    %366 = vmatpush.msra.mxu0 %v233
    %367 = vmatmul.f32.gmra.mxu0 %v60
    %v368 = vpop.f32.mrf.mxu0
    %v369 = vadd.f32 0.0, %v368
    %370 = vmatmul.f32.gmra.mxu0 %v61
    %v371 = vpop.f32.mrf.mxu0
    %v372 = vadd.f32 0.0, %v371
    %373 = vmatmul.f32.gmra.mxu0 %v62
    %v374 = vpop.f32.mrf.mxu0
    %v375 = vadd.f32 0.0, %v374
    %376 = vmatmul.f32.gmra.mxu0 %v63
    %v377 = vpop.f32.mrf.mxu0
    %v378 = vadd.f32 0.0, %v377
    %379 = vdwg.mxu0
    %v380 = vmul.f32 %v282, %v340
    %v381 = vmul.f32 %v311, %v369
    %v382 = vmul.f32 %v285, %v343
    %v383 = vmul.f32 %v314, %v372
    %v384 = vmul.f32 %v288, %v346
    %v385 = vmul.f32 %v317, %v375
    %v386 = vmul.f32 %v291, %v349
    %v387 = vmul.f32 %v320, %v378
    %v388 = vadd.f32 %v380, %v382
    %v389 = vadd.f32 %v388, %v384
    %v390 = vadd.f32 %v389, %v386
    %v391 = vrot.slane %v390, 4
    %v392 = vadd.f32 %v390, %v391
    %v393 = vrot.slane %v392, 2
    %v394 = vadd.f32 %v392, %v393
    %v395 = vrot.slane %v394, 1
    %v396 = vadd.f32 %v394, %v395
    %v397 = vadd.f32 %v381, %v383
    %v398 = vadd.f32 %v397, %v385
    %v399 = vadd.f32 %v398, %v387
    %v400 = vrot.slane %v399, 4
    %v401 = vadd.f32 %v399, %v400
    %v402 = vrot.slane %v401, 2
    %v403 = vadd.f32 %v401, %v402
    %v404 = vrot.slane %v403, 1
    %v405 = vadd.f32 %v403, %v404
    %v408 = vrot.slane %v405, 7
    %vm409 = vcmask 1040384
    %v410 = vsel %vm409, %v396, %v408
    %v412 = vlaneseq
    %vm413 = vcmp.ge.s32.totalorder %v412, 0
    %vm414 = vcmp.lt.s32.totalorder %v412, 256
    %vm415 = vmand %vm413, %vm414
    %416 = vst.msk [vmem:[#allocation7] sm:$0x3] %vm415, %v410
    // Predicated region
    $region18: #{tpu_custom_call.1} parent=1 // pred_check
      _
    $region19: #{tpu_custom_call.1} parent=1 // pred_check_branch
      %418 = sbr.rel (0) target = $region21
    $region20: #{tpu_custom_call.1} parent=1 // pred_region
      %420 = vsyncadd [#allocation4], 0
      %s422 = sshll.u32 [#allocation7], 4
      %s423 = int_to_ptr.vmem [resolvable:$true] %s422
      %s424 = sshll.u32 %s2, 4
      %s425 = int_to_ptr.hbm [resolvable:$true] %s424
      %427 = dma.vmem_to_hbm [thread:$0]  %s423, 32, %s425, [#allocation4]
    $region21: #{tpu_custom_call.1} parent=1 // pred_fallthru
      _
    // Predicated region
    $region22: #{tpu_custom_call.1} parent=1 // pred_check
      _
    $region23: #{tpu_custom_call.1} parent=1 // pred_check_branch
      %429 = sbr.rel (0) target = $region25
    $region24: #{tpu_custom_call.1} parent=1 // pred_region
      %431 = dma.done [#allocation4], 32
    $region25: #{tpu_custom_call.1} parent=1 // pred_fallthru
      _
    %432 = vsyncpa [#allocation3], 1
    %433 = vsyncpa [#allocation6], 1
    %434 = vsyncpa [#allocation4], 1

</llo_original>
